<compile_context>
chip_gen: v5e
topology: v5e:2x2
jax: 0.10.0
libtpu: 0.0.40
codegen_flags: <defaults>
</compile_context>

<pallas_src>
import functools

import jax
import jax.numpy as jnp
from jax.experimental import pallas as pl
from jax.experimental.pallas import tpu as pltpu

LANE_W = 512           # lane-dense last dim -> unmasked, full-width vector stores
BLOCK_ROWS = 2048      # (2048, 512) f32 block = 4 MiB per buffer
VMEM_LIMIT = 32 << 20  # room for in+out double-buffering of 4 MiB blocks on all chips


def _noise_hw_kernel(seed_ref, x_ref, o_ref, *, sigma):
    # Independent PRNG stream per grid step (avoids identical noise per tile).
    pltpu.prng_seed(seed_ref[0], pl.program_id(0))
    x = x_ref[...].astype(jnp.float32)
    noise = pltpu.stateful_normal(x.shape, jnp.float32)
    # x + N(0,1) * (sigma * x)  ==  x * (1 + sigma * N(0,1))
    o_ref[...] = (x * (1.0 + sigma * noise)).astype(o_ref.dtype)


def _noise_ext_kernel(x_ref, n_ref, o_ref, *, sigma):
    # Fallback path: standard-normal noise supplied as a second input.
    x = x_ref[...].astype(jnp.float32)
    o_ref[...] = (x * (1.0 + sigma * n_ref[...])).astype(o_ref.dtype)


def gaussian_noise(x, seed, *, sigma=0.1, training=True, is_relative_detach=True):
    """Forward pass of the PyTorch GaussianNoise module."""
    del is_relative_detach  # forward-only: detach changes gradients, not values
    if not training or sigma == 0:
        return x

    orig_shape, orig_dtype = x.shape, x.dtype
    total = x.size

    # Lane-dense 2D slab: (rows, 512).
    #   * small inputs  -> one full-array block (exempt from the (8,128) rule)
    #   * large inputs  -> 1-D grid of (BLOCK_ROWS, 512) blocks; the last block
    #     may be partial (Pallas masks the edge), so nicely-sized tensors need
    #     no padding copy at all.
    rows_needed = -(-total // LANE_W)
    if rows_needed <= BLOCK_ROWS:
        rows = rows_needed
        block_rows = rows
        grid = 1
    else:
        rows = -(-rows_needed // 8) * 8       # keep the edge block sublane-aligned
        block_rows = BLOCK_ROWS
        grid = -(-rows // BLOCK_ROWS)
    padded_total = rows * LANE_W

    flat = jnp.ravel(x)  # keep original dtype: no f32 staging copies in HBM
    if padded_total != total:
        flat = jnp.pad(flat, (0, padded_total - total))
    flat2d = flat.reshape(rows, LANE_W)

    use_hw_prng = jax.default_backend() == "tpu"

    if use_hw_prng:
        seed_arr = jnp.asarray([seed], dtype=jnp.int32)
        out2d = pl.pallas_call(
            functools.partial(_noise_hw_kernel, sigma=float(sigma)),
            out_shape=jax.ShapeDtypeStruct((rows, LANE_W), orig_dtype),
            grid_spec=pltpu.PrefetchScalarGridSpec(
                num_scalar_prefetch=1,  # seed lands in SMEM
                grid=(grid,),
                in_specs=[pl.BlockSpec((block_rows, LANE_W), lambda i, s: (i, 0))],
                out_specs=pl.BlockSpec((block_rows, LANE_W), lambda i, s: (i, 0)),
            ),
            compiler_params=pltpu.CompilerParams(
                dimension_semantics=("parallel",),  # v7x: shard grid over both TCs
                has_side_effects=True,              # PRNG state mutation
                vmem_limit_bytes=VMEM_LIMIT,
            ),
        )(seed_arr, flat2d)
    else:
        # TODO(synk): pltpu.prng_seed / pltpu.stateful_normal only lower on real
        # TPU; off-TPU (CPU / interpret mode) the N(0,1) draw is precomputed.
        noise = jax.random.normal(jax.random.PRNGKey(seed), (rows, LANE_W), jnp.float32)
        out2d = pl.pallas_call(
            functools.partial(_noise_ext_kernel, sigma=float(sigma)),
            out_shape=jax.ShapeDtypeStruct((rows, LANE_W), orig_dtype),
            grid=(grid,),
            in_specs=[pl.BlockSpec((block_rows, LANE_W), lambda i: (i, 0)),
                      pl.BlockSpec((block_rows, LANE_W), lambda i: (i, 0))],
            out_specs=pl.BlockSpec((block_rows, LANE_W), lambda i: (i, 0)),
        )(flat2d, noise)

    out = out2d.reshape(-1)
    if padded_total != total:
        out = out[:total]
    return out.reshape(orig_shape)


if __name__ == "__main__":
    key = jax.random.PRNGKey(0)
    # Small NCHW input consistent with a conv-style feature map.
    x = jax.random.normal(key, (2, 4, 16, 16), dtype=jnp.float32)

    y = jax.block_until_ready(gaussian_noise(x, seed=42, sigma=0.1, training=True))
    assert y.shape == x.shape and y.dtype == x.dtype
    assert bool(jnp.all(jnp.isfinite(y)))
    assert not bool(jnp.allclose(y, x))
    rel = jnp.abs(y - x) / (jnp.abs(x) + 1e-12)
    assert float(jnp.max(rel)) < 1.0          # |N(0,1)| * 0.1 stays well below 1
    mean_rel = float(jnp.mean(rel))
    assert 0.02 < mean_rel < 0.3              # E[|N(0,1)|] * 0.1 ~= 0.08

    # Eval mode / sigma == 0 -> identity.
    y_eval = jax.block_until_ready(gaussian_noise(x, seed=42, sigma=0.1, training=False))
    assert bool(jnp.array_equal(y_eval, x))
    y_zero = jax.block_until_ready(gaussian_noise(x, seed=42, sigma=0.0, training=True))
    assert bool(jnp.array_equal(y_zero, x))

    # Non-tile-aligned shape + bf16 exercises the pad/slice and dtype paths.
    x_odd = jax.random.normal(jax.random.PRNGKey(1), (3, 5, 7, 11), dtype=jnp.bfloat16)
    y_odd = jax.block_until_ready(gaussian_noise(x_odd, seed=7, sigma=0.1))
    assert y_odd.shape == x_odd.shape and y_odd.dtype == x_odd.dtype

    # Multi-block path (grid > 1, partial edge block, no pad copy):
    # (4, 8, 250, 256) = 2,048,000 elems = 4000 rows of 512 -> grid of 2 blocks,
    # second block has 1952 valid rows.  Tiles must draw different noise.
    x_big = jax.random.normal(jax.random.PRNGKey(2), (4, 8, 250, 256), dtype=jnp.float32)
    y_big = jax.block_until_ready(gaussian_noise(x_big, seed=3, sigma=0.1))
    assert y_big.shape == x_big.shape and y_big.dtype == x_big.dtype
    assert bool(jnp.all(jnp.isfinite(y_big)))
    noise_big = ((y_big - x_big) / (0.1 * x_big)).reshape(-1)
    blk = BLOCK_ROWS * LANE_W
    assert not bool(jnp.allclose(noise_big[:LANE_W], noise_big[blk:blk + LANE_W]))
    # Values in the partial edge block were written correctly (perturbed, finite).
    tail = noise_big[-LANE_W:]
    assert bool(jnp.all(jnp.isfinite(tail))) and not bool(jnp.allclose(tail, 0.0))

    print("KERNEL_OK")
</pallas_src>

<mosaic_0001>
module attributes {stable_mosaic.version = 11 : i64} {
  func.func @_noise_ext_kernel(%arg0: i32, %arg1: memref<4x512xf32, #tpu.memory_space<vmem>>, %arg2: memref<4x512xf32, #tpu.memory_space<vmem>>, %arg3: memref<4x512xf32, #tpu.memory_space<vmem>>) attributes {dimension_semantics = [#tpu.dimension_semantics<arbitrary>], iteration_bounds = array<i64: 1>, scalar_prefetch = 0 : i64, scratch_operands = 0 : i64, tpu.core_type = #tpu.core_type<tc>, window_params = [{transform_indices = @transform_0, window_bounds = array<i64: 4, 512>}, {transform_indices = @transform_1, window_bounds = array<i64: 4, 512>}, {transform_indices = @transform_2, window_bounds = array<i64: 4, 512>}]} {
    %c0 = arith.constant 0 : index
    %c0_0 = arith.constant 0 : index
    %0 = vector.load %arg1[%c0, %c0_0] : memref<4x512xf32, #tpu.memory_space<vmem>>, vector<4x512xf32>
    %c0_1 = arith.constant 0 : index
    %c0_2 = arith.constant 0 : index
    %1 = vector.load %arg2[%c0_1, %c0_2] : memref<4x512xf32, #tpu.memory_space<vmem>>, vector<4x512xf32>
    %cst = arith.constant 1.000000e-01 : f32
    %2 = vector.broadcast %cst : f32 to vector<4x512xf32>
    %3 = arith.mulf %2, %1 : vector<4x512xf32>
    %cst_3 = arith.constant 1.000000e+00 : f32
    %4 = vector.broadcast %cst_3 : f32 to vector<4x512xf32>
    %5 = arith.addf %4, %3 : vector<4x512xf32>
    %6 = arith.mulf %0, %5 : vector<4x512xf32>
    %c0_4 = arith.constant 0 : index
    %c0_5 = arith.constant 0 : index
    %7 = vector.load %arg3[%c0_4, %c0_5] : memref<4x512xf32, #tpu.memory_space<vmem>>, vector<4x512xf32>
    tpu.vector_store %arg3[%c0_4, %c0_5], %6 {strides = array<i32>} : memref<4x512xf32, #tpu.memory_space<vmem>>, vector<4x512xf32>,
    return
  }
  func.func @transform_0(%arg0: i32) -> (i32, i32) {
    %c0_i32 = arith.constant 0 : i32
    %c0_i32_0 = arith.constant 0 : i32
    return %arg0, %c0_i32 : i32, i32
  }
  func.func @transform_1(%arg0: i32) -> (i32, i32) {
    %c0_i32 = arith.constant 0 : i32
    %c0_i32_0 = arith.constant 0 : i32
    return %arg0, %c0_i32 : i32, i32
  }
  func.func @transform_2(%arg0: i32) -> (i32, i32) {
    %c0_i32 = arith.constant 0 : i32
    %c0_i32_0 = arith.constant 0 : i32
    return %arg0, %c0_i32 : i32, i32
  }
}

</mosaic_0001>

<llo_original>
// kernel: tpu_custom_call.1
$region0: #{tpu_custom_call.1}
  #allocation0 [shape = 'u32[]', space=smem, size = 0x4, offset = 0x4, fixed_abs, tag = 'smem constant byte address 0x4 - core index']
  #allocation1 [shape = 'u32[72,128]{1,0:T(1,128)}', space=vmem, size = 0x9000, scoped, tag = 'internal scratch']
  %s0 = inlined_call_operand.hbm [shape: f32[4,512], index: 0, kind: input, shape index: {}]
  %s1 = inlined_call_operand.hbm [shape: f32[4,512], index: 1, kind: input, shape index: {}]
  %s2 = inlined_call_operand.hbm [shape: f32[4,512], index: 2, kind: output, shape index: {}]
  %s3 = sld [smem:[#allocation0]]
  $region26: #{tpu_custom_call.1} parent=0
    _
  %s5 = ssub.s32 1, %s3
  %s6 = scalar_select 0, %s5, %s3
  $region1: #{tpu_custom_call.1} parent=0
    #allocation2 [shape = 'u8[8192]{0}', space=vmem, size = 0x2000, scoped, tag = 'input window, operand 0, single buffered']
    #allocation3 [shape = 's32[1]{0}', space=sflag, size = 0x4, scoped, tag = 'scoped memory for tpu_custom_call.1']
    #allocation4 [shape = 's32[1]{0}', space=sflag, size = 0x4, scoped, tag = 'scoped memory for tpu_custom_call.1']
    #allocation5 [shape = 'u8[8192]{0}', space=vmem, size = 0x2000, scoped, tag = 'input window, operand 1, single buffered']
    #allocation6 [shape = 's32[1]{0}', space=sflag, size = 0x4, scoped, tag = 'scoped memory for tpu_custom_call.1']
    #allocation7 [shape = 'u8[8192]{0}', space=vmem, size = 0x2000, scoped, tag = 'output window, operand 0, single buffered']
    %7 = vsyncpa [#allocation3], 0
    %8 = vsyncpa [#allocation6], 0
    %9 = vsyncpa [#allocation4], 0
    // Predicated region
    $region2: #{tpu_custom_call.1} parent=1 // pred_check
      _
    $region3: #{tpu_custom_call.1} parent=1 // pred_check_branch
      %11 = sbr.rel (0) target = $region5
    $region4: #{tpu_custom_call.1} parent=1 // pred_region
      %13 = vsyncadd [#allocation3], 0
      %s15 = sshll.u32 %s0, 4
      %s16 = int_to_ptr.hbm [resolvable:$true] %s15
      %s17 = sshll.u32 [#allocation2], 4
      %s18 = int_to_ptr.vmem [resolvable:$true] %s17
      %20 = dma.hbm_to_vmem [thread:$0]  %s16, 256, %s18, [#allocation3]
    $region5: #{tpu_custom_call.1} parent=1 // pred_fallthru
      _
    // Predicated region
    $region6: #{tpu_custom_call.1} parent=1 // pred_check
      _
    $region7: #{tpu_custom_call.1} parent=1 // pred_check_branch
      %22 = sbr.rel (0) target = $region9
    $region8: #{tpu_custom_call.1} parent=1 // pred_region
      %24 = vsyncadd [#allocation6], 0
      %s26 = sshll.u32 %s1, 4
      %s27 = int_to_ptr.hbm [resolvable:$true] %s26
      %s28 = sshll.u32 [#allocation5], 4
      %s29 = int_to_ptr.vmem [resolvable:$true] %s28
      %31 = dma.hbm_to_vmem [thread:$0]  %s27, 256, %s29, [#allocation6]
    $region9: #{tpu_custom_call.1} parent=1 // pred_fallthru
      _
    // Predicated region
    $region10: #{tpu_custom_call.1} parent=1 // pred_check
      _
    $region11: #{tpu_custom_call.1} parent=1 // pred_check_branch
      %33 = sbr.rel (0) target = $region13
    $region12: #{tpu_custom_call.1} parent=1 // pred_region
      %35 = dma.done [#allocation3], 256
    $region13: #{tpu_custom_call.1} parent=1 // pred_fallthru
      _
    // Predicated region
    $region14: #{tpu_custom_call.1} parent=1 // pred_check
      _
    $region15: #{tpu_custom_call.1} parent=1 // pred_check_branch
      %37 = sbr.rel (0) target = $region17
    $region16: #{tpu_custom_call.1} parent=1 // pred_region
      %39 = dma.done [#allocation6], 256
    $region17: #{tpu_custom_call.1} parent=1 // pred_fallthru
      _
    %v40 = vld [vmem:[#allocation2] sm:$0xff]
    %v41 = vld [vmem:[#allocation2 + $0x8] sm:$0xff]
    %v42 = vld [vmem:[#allocation5] sm:$0xff]
    %v43 = vld [vmem:[#allocation5 + $0x8] sm:$0xff]
    %v44 = vmul.f32 %v42, 0.1
    %v45 = vmul.f32 %v43, 0.1
    %v46 = vadd.f32 %v44, 1.0
    %v47 = vadd.f32 %v45, 1.0
    %v48 = vmul.f32 %v40, %v46
    %v49 = vmul.f32 %v41, %v47
    %50 = vst [vmem:[#allocation7] sm:$0xff] %v48
    %51 = vst [vmem:[#allocation7 + $0x8] sm:$0xff] %v49
    // Predicated region
    $region18: #{tpu_custom_call.1} parent=1 // pred_check
      _
    $region19: #{tpu_custom_call.1} parent=1 // pred_check_branch
      %53 = sbr.rel (0) target = $region21
    $region20: #{tpu_custom_call.1} parent=1 // pred_region
      %55 = vsyncadd [#allocation4], 0
      %s57 = sshll.u32 [#allocation7], 4
      %s58 = int_to_ptr.vmem [resolvable:$true] %s57
      %s59 = sshll.u32 %s2, 4
      %s60 = int_to_ptr.hbm [resolvable:$true] %s59
      %62 = dma.vmem_to_hbm [thread:$0]  %s58, 256, %s60, [#allocation4]
    $region21: #{tpu_custom_call.1} parent=1 // pred_fallthru
      _
    // Predicated region
    $region22: #{tpu_custom_call.1} parent=1 // pred_check
      _
    $region23: #{tpu_custom_call.1} parent=1 // pred_check_branch
      %64 = sbr.rel (0) target = $region25
    $region24: #{tpu_custom_call.1} parent=1 // pred_region
      %66 = dma.done [#allocation4], 256
    $region25: #{tpu_custom_call.1} parent=1 // pred_fallthru
      _
    %67 = vsyncpa [#allocation3], 1
    %68 = vsyncpa [#allocation6], 1
    %69 = vsyncpa [#allocation4], 1

</llo_original>
